<compile_context>
chip_gen: v7x
topology: tpu7x:2x2x1
jax: 0.10.0
libtpu: 0.0.40
codegen_flags: <defaults>
</compile_context>

<pallas_src>
from functools import partial

import jax
import jax.numpy as jnp
from jax.experimental import pallas as pl
from jax.experimental.pallas import tpu as pltpu


def _coupling_kernel(x_ref, w1t_ref, b1_ref, w2t_ref, b2_ref, z2_ref, *, sub):
    """One (batch, spatial-tile) grid step, channels-first layout.

    x_ref  : (1, 2, C/2, TS)   both channel halves of the input tile
    w1t_ref: (HID, C/2)        first pointwise weight, transposed (contract over C/2)
    b1_ref : (HID, 1)
    w2t_ref: (C/2, HID)        second pointwise weight, transposed
    b2_ref : (C/2, 1)
    z2_ref : (1, 1, C/2, TS)   ONLY the updated half is written back
                               (the x1 half stays in HBM via input_output_aliases)

    forward (sub=False): z2 = x2 + F(x1)
    reverse (sub=True) : x2 = z2 - F(z1)
    with F(a) = W2^T @ relu(W1^T @ a + b1) + b2   (channels on sublanes, spatial on lanes)
    """
    x1 = x_ref[0, 0].astype(jnp.float32)          # (C/2, TS)
    x2 = x_ref[0, 1].astype(jnp.float32)          # (C/2, TS)

    h = jnp.dot(w1t_ref[...], x1, preferred_element_type=jnp.float32) + b1_ref[...]
    h = jnp.maximum(h, 0.0)                       # relu on VPU
    f = jnp.dot(w2t_ref[...], h, preferred_element_type=jnp.float32) + b2_ref[...]

    z2 = (x2 - f) if sub else (x2 + f)            # static sign specialization
    z2_ref[0, 0] = z2.astype(z2_ref.dtype)        # single lane-dense store of the new half


def _choose_tile_s(s, c_half, dtype_bytes, vmem_budget_bytes=8 << 20):
    """Pick the spatial tile: as large as fits a VMEM tile-buffer budget.

    Per column held in VMEM: x block (2*C/2 rows) + z2 block (C/2 rows), each
    double-buffered by the pipeline.
    """
    per_col = (2 * c_half + c_half) * dtype_bytes * 2
    max_cols = max(128, vmem_budget_bytes // per_col)
    if s <= max_cols:
        return s                                  # full spatial extent (legal even if <128)
    return (max_cols // 128) * 128                # lane-aligned tile, cdiv grid handles the tail


def _coupling_call(x4, w1t, b1, w2t, b2, *, sub, tile_s=None):
    """x4: (B, 2, C/2, S) channels-first (free reshape of NCHW). Returns same shape."""
    b, two, c_half, s = x4.shape
    assert two == 2
    hid = w1t.shape[0]
    dtype_bytes = jnp.dtype(x4.dtype).itemsize
    if tile_s is None:
        tile_s = _choose_tile_s(s, c_half, dtype_bytes)
    n_s = pl.cdiv(s, tile_s)

    kernel = partial(_coupling_kernel, sub=sub)

    # Explicit VMEM limit with headroom, capped under v7x's 64 MiB per-core VMEM.
    tile_bytes = 2 * (2 * c_half * tile_s * dtype_bytes) + 2 * (c_half * tile_s * dtype_bytes)
    weight_bytes = 2 * 4 * (w1t.size + b1.size + w2t.size + b2.size)
    need = int(tile_bytes + weight_bytes + (2 << 20))
    vmem_limit = int(max(min(max(2 * need, 16 << 20), 48 << 20), need))

    return pl.pallas_call(
        kernel,
        out_shape=jax.ShapeDtypeStruct((b, 2, c_half, s), x4.dtype),
        grid_spec=pltpu.PrefetchScalarGridSpec(
            num_scalar_prefetch=0,
            grid=(b, n_s),
            in_specs=[
                # x: both channel halves of one spatial tile (lane-dense, no in-kernel lane slicing)
                pl.BlockSpec((1, 2, c_half, tile_s), lambda i, j: (i, 0, 0, j)),
                # weights/biases: full blocks, constant index map -> stay resident in VMEM
                pl.BlockSpec((hid, c_half), lambda i, j: (0, 0)),
                pl.BlockSpec((hid, 1), lambda i, j: (0, 0)),
                pl.BlockSpec((c_half, hid), lambda i, j: (0, 0)),
                pl.BlockSpec((c_half, 1), lambda i, j: (0, 0)),
            ],
            # Output blocks only cover the z2 channel-half; the x1 half of the
            # (aliased) output buffer keeps its original values and never
            # re-crosses HBM.
            out_specs=pl.BlockSpec((1, 1, c_half, tile_s), lambda i, j: (i, 1, 0, j)),
        ),
        input_output_aliases={0: 0},
        compiler_params=pltpu.CompilerParams(
            dimension_semantics=("parallel", "parallel"),
            vmem_limit_bytes=vmem_limit,
        ),
    )(x4, w1t, b1, w2t, b2)


class ReversibleAdditiveCoupling:
    """JAX/Pallas mirror of the PyTorch `Reversible` dispatch semantics,
    instantiated with an additive (volume-preserving) coupling block."""

    def __init__(self, reverse_mode: bool, channels: int, hidden: int, key):
        assert channels % 2 == 0
        self._reverse_mode = bool(reverse_mode)
        c_half = channels // 2
        k1, k2 = jax.random.split(key)
        # deterministic synthetic parameters (no checkpoint load)
        w1 = jax.random.normal(k1, (c_half, hidden), jnp.float32) * (1.0 / jnp.sqrt(c_half))
        w2 = jax.random.normal(k2, (hidden, c_half), jnp.float32) * (1.0 / jnp.sqrt(hidden))
        # store channels-first (transposed) weights once so the kernel contracts over C
        self.w1t = jnp.asarray(w1.T)                      # (hidden, C/2)
        self.w2t = jnp.asarray(w2.T)                      # (C/2, hidden)
        self.b1 = jnp.zeros((hidden, 1), jnp.float32)
        self.b2 = jnp.zeros((c_half, 1), jnp.float32)
        self.channels = channels
        # TODO(synk): bf16 activations would halve HBM traffic on v6e/v7x but
        # break exact float reversibility of the add/sub pair; kept f32.

    # ---- the two computations (hot path in Pallas) -----------------------
    def _run(self, x_nchw, sub):
        b, c, h, w = x_nchw.shape
        c_half = c // 2
        s = h * w
        x4 = x_nchw.reshape(b, 2, c_half, s)              # free reshape, no transpose
        z4 = _coupling_call(x4, self.w1t, self.b1, self.w2t, self.b2, sub=sub)
        z = z4.reshape(b, c, h, w)                        # free reshape back to NCHW
        logdet = jnp.zeros((b,), x_nchw.dtype)            # additive coupling: log|det J| = 0
        return z, logdet

    def forward_computation(self, x):
        return self._run(x, sub=False)

    def reverse_computation(self, z):
        return self._run(z, sub=True)

    # ---- the Reversible dispatch (exact semantics of the base class) -----
    def forward(self, x):
        if self._reverse_mode:
            return self.reverse_computation(x)
        return self.forward_computation(x)

    def reverse(self, z):
        if self._reverse_mode:
            return self.forward_computation(z)
        return self.reverse_computation(z)

    __call__ = forward


def _reference_coupling(x_nchw, w1t, b1, w2t, b2, sign):
    """Pure-JAX reference (NCHW in, NCHW out) for correctness checking."""
    b, c, h, w = x_nchw.shape
    ch = c // 2
    x1 = x_nchw[:, :ch].reshape(b, ch, h * w)
    x2 = x_nchw[:, ch:].reshape(b, ch, h * w)
    hid = jnp.maximum(jnp.einsum("kc,bcs->bks", w1t, x1) + b1[None], 0.0)
    f = jnp.einsum("ck,bks->bcs", w2t, hid) + b2[None]
    z2 = x2 + sign * f
    return jnp.concatenate([x1, z2], axis=1).reshape(b, c, h, w)


if __name__ == "__main__":
    key = jax.random.PRNGKey(0)
    k_param, k_x = jax.random.split(key)

    B, C, H, W = 2, 4, 16, 16          # small NCHW input, C even
    HIDDEN = 32
    x = jax.random.normal(k_x, (B, C, H, W), jnp.float32)

    mod = ReversibleAdditiveCoupling(reverse_mode=False, channels=C,
                                     hidden=HIDDEN, key=k_param)

    # forward pass through the Pallas kernel
    z, logdet = mod(x)
    z = jax.block_until_ready(z)
    logdet = jax.block_until_ready(logdet)

    # correctness vs. pure-JAX reference
    z_ref = _reference_coupling(x, mod.w1t, mod.b1, mod.w2t, mod.b2, sign=1.0)
    assert jnp.allclose(z, z_ref, atol=1e-5, rtol=1e-5), "forward mismatch"
    assert z.shape == (B, C, H, W) and logdet.shape == (B,)

    # the x1 half must pass through untouched (aliased, never rewritten by the kernel)
    assert jnp.array_equal(z[:, : C // 2], x[:, : C // 2]), "x1 half was modified"

    # reversibility check: reverse(forward(x)) == x
    x_rec, _ = mod.reverse(z)
    x_rec = jax.block_until_ready(x_rec)
    assert jnp.allclose(x_rec, x, atol=1e-5, rtol=1e-5), "reverse mismatch"

    print("KERNEL_OK")
</pallas_src>

<mosaic_0001>
module attributes {stable_mosaic.version = 11 : i64} {
  func.func @_coupling_kernel(%arg0: i32, %arg1: i32, %arg2: memref<1x2x2x256xf32, #tpu.memory_space<vmem>>, %arg3: memref<32x2xf32, #tpu.memory_space<vmem>>, %arg4: memref<32x1xf32, #tpu.memory_space<vmem>>, %arg5: memref<2x32xf32, #tpu.memory_space<vmem>>, %arg6: memref<2x1xf32, #tpu.memory_space<vmem>>, %arg7: memref<1x1x2x256xf32, #tpu.memory_space<vmem>>) attributes {dimension_semantics = [#tpu.dimension_semantics<parallel>, #tpu.dimension_semantics<parallel>], iteration_bounds = array<i64: 2, 1>, scalar_prefetch = 0 : i64, scratch_operands = 0 : i64, tpu.core_type = #tpu.core_type<tc>, window_params = [{transform_indices = @transform_0, window_bounds = array<i64: 1, 2, 2, 256>}, {pipeline_mode = #tpu.pipeline_mode<synchronous>, transform_indices = @transform_1, window_bounds = array<i64: 32, 2>}, {pipeline_mode = #tpu.pipeline_mode<synchronous>, transform_indices = @transform_2, window_bounds = array<i64: 32, 1>}, {pipeline_mode = #tpu.pipeline_mode<synchronous>, transform_indices = @transform_3, window_bounds = array<i64: 2, 32>}, {pipeline_mode = #tpu.pipeline_mode<synchronous>, transform_indices = @transform_4, window_bounds = array<i64: 2, 1>}, {transform_indices = @transform_5, window_bounds = array<i64: 1, 1, 2, 256>}]} {
    %c0 = arith.constant 0 : index
    %c0_0 = arith.constant 0 : index
    %c0_1 = arith.constant 0 : index
    %c0_2 = arith.constant 0 : index
    %0 = vector.load %arg2[%c0, %c0_0, %c0_1, %c0_2] : memref<1x2x2x256xf32, #tpu.memory_space<vmem>>, vector<1x1x2x256xf32>
    %1 = vector.shape_cast %0 : vector<1x1x2x256xf32> to vector<2x256xf32>
    %c0_3 = arith.constant 0 : index
    %c1 = arith.constant 1 : index
    %c0_4 = arith.constant 0 : index
    %c0_5 = arith.constant 0 : index
    %2 = vector.load %arg2[%c0_3, %c1, %c0_4, %c0_5] : memref<1x2x2x256xf32, #tpu.memory_space<vmem>>, vector<1x1x2x256xf32>
    %3 = vector.shape_cast %2 : vector<1x1x2x256xf32> to vector<2x256xf32>
    %c0_6 = arith.constant 0 : index
    %c0_7 = arith.constant 0 : index
    %4 = vector.load %arg3[%c0_6, %c0_7] : memref<32x2xf32, #tpu.memory_space<vmem>>, vector<32x2xf32>
    %cst = arith.constant dense<0.000000e+00> : vector<32x256xf32>
    %5 = tpu.matmul %4, %1, %cst {dimension_numbers = #tpu.dot_dimension_numbers<[1], [0], [0], [1], [0, 0, 1, 1], [], []>} : vector<32x2xf32>, vector<2x256xf32>, vector<32x256xf32> -> vector<32x256xf32>
    %c0_8 = arith.constant 0 : index
    %c0_9 = arith.constant 0 : index
    %6 = vector.load %arg4[%c0_8, %c0_9] : memref<32x1xf32, #tpu.memory_space<vmem>>, vector<32x1xf32>
    %7 = vector.broadcast %6 : vector<32x1xf32> to vector<32x256xf32>
    %8 = arith.addf %5, %7 : vector<32x256xf32>
    %cst_10 = arith.constant 0.000000e+00 : f32
    %9 = vector.broadcast %cst_10 : f32 to vector<32x256xf32>
    %10 = arith.maximumf %8, %9 : vector<32x256xf32>
    %c0_11 = arith.constant 0 : index
    %c0_12 = arith.constant 0 : index
    %11 = vector.load %arg5[%c0_11, %c0_12] : memref<2x32xf32, #tpu.memory_space<vmem>>, vector<2x32xf32>
    %cst_13 = arith.constant dense<0.000000e+00> : vector<2x256xf32>
    %12 = tpu.matmul %11, %10, %cst_13 {dimension_numbers = #tpu.dot_dimension_numbers<[1], [0], [0], [1], [0, 0, 1, 1], [], []>} : vector<2x32xf32>, vector<32x256xf32>, vector<2x256xf32> -> vector<2x256xf32>
    %c0_14 = arith.constant 0 : index
    %c0_15 = arith.constant 0 : index
    %13 = vector.load %arg6[%c0_14, %c0_15] : memref<2x1xf32, #tpu.memory_space<vmem>>, vector<2x1xf32>
    %14 = vector.broadcast %13 : vector<2x1xf32> to vector<2x256xf32>
    %15 = arith.addf %12, %14 : vector<2x256xf32>
    %16 = arith.addf %3, %15 : vector<2x256xf32>
    %c0_16 = arith.constant 0 : index
    %c0_17 = arith.constant 0 : index
    %c0_18 = arith.constant 0 : index
    %c0_19 = arith.constant 0 : index
    %17 = vector.load %arg7[%c0_16, %c0_17, %c0_18, %c0_19] : memref<1x1x2x256xf32, #tpu.memory_space<vmem>>, vector<1x1x2x256xf32>
    %18 = vector.shape_cast %17 : vector<1x1x2x256xf32> to vector<2x256xf32>
    %19 = vector.shape_cast %16 : vector<2x256xf32> to vector<1x1x2x256xf32>
    tpu.vector_store %arg7[%c0_16, %c0_17, %c0_18, %c0_19], %19 {strides = array<i32>} : memref<1x1x2x256xf32, #tpu.memory_space<vmem>>, vector<1x1x2x256xf32>,
    return
  }
  func.func @transform_0(%arg0: i32, %arg1: i32) -> (i32, i32, i32, i32) {
    %c0_i32 = arith.constant 0 : i32
    %c0_i32_0 = arith.constant 0 : i32
    %c0_i32_1 = arith.constant 0 : i32
    return %arg0, %c0_i32, %c0_i32_0, %arg1 : i32, i32, i32, i32
  }
  func.func @transform_1(%arg0: i32, %arg1: i32) -> (i32, i32) {
    %c0_i32 = arith.constant 0 : i32
    %c0_i32_0 = arith.constant 0 : i32
    %c0_i32_1 = arith.constant 0 : i32
    return %c0_i32, %c0_i32_0 : i32, i32
  }
  func.func @transform_2(%arg0: i32, %arg1: i32) -> (i32, i32) {
    %c0_i32 = arith.constant 0 : i32
    %c0_i32_0 = arith.constant 0 : i32
    %c0_i32_1 = arith.constant 0 : i32
    return %c0_i32, %c0_i32_0 : i32, i32
  }
  func.func @transform_3(%arg0: i32, %arg1: i32) -> (i32, i32) {
    %c0_i32 = arith.constant 0 : i32
    %c0_i32_0 = arith.constant 0 : i32
    %c0_i32_1 = arith.constant 0 : i32
    return %c0_i32, %c0_i32_0 : i32, i32
  }
  func.func @transform_4(%arg0: i32, %arg1: i32) -> (i32, i32) {
    %c0_i32 = arith.constant 0 : i32
    %c0_i32_0 = arith.constant 0 : i32
    %c0_i32_1 = arith.constant 0 : i32
    return %c0_i32, %c0_i32_0 : i32, i32
  }
  func.func @transform_5(%arg0: i32, %arg1: i32) -> (i32, i32, i32, i32) {
    %c1_i32 = arith.constant 1 : i32
    %c0_i32 = arith.constant 0 : i32
    %c0_i32_0 = arith.constant 0 : i32
    return %arg0, %c1_i32, %c0_i32, %arg1 : i32, i32, i32, i32
  }
}

</mosaic_0001>

<llo_original>
// kernel: tpu_custom_call.1
$region0: #{tpu_custom_call.1}
  #allocation0 [shape = 'u32[]', space=smem, size = 0x4, offset = 0x4, fixed_abs, tag = 'smem constant byte address 0x4 - core index']
  #allocation1 [shape = 'u32[144,128]{1,0:T(1,128)}', space=vmem, size = 0x12000, scoped, tag = 'internal scratch']
  %s0 = inlined_call_operand.hbm [shape: f32[2,2,2,256], index: 0, kind: input, shape index: {}, may-alias: {0,5}]
  %s1 = inlined_call_operand.vmem [shape: f32[32,2], index: 1, kind: input, shape index: {}]
  %s2 = inlined_call_operand.vmem [shape: f32[32,1], index: 2, kind: input, shape index: {}]
  %s3 = inlined_call_operand.vmem [shape: f32[2,32], index: 3, kind: input, shape index: {}]
  %s4 = inlined_call_operand.vmem [shape: f32[2,1], index: 4, kind: input, shape index: {}]
  %s5 = inlined_call_operand.hbm [shape: f32[2,2,2,256], index: 5, kind: output, shape index: {}, may-alias: {0,5}]
  %s6 = sld [smem:[#allocation0]]
  $region57: #{tpu_custom_call.1} parent=0
    _
  %s8 = ssub.s32 1, %s6
  %s9 = scalar_select 0, %s8, %s6
  $region1: #{tpu_custom_call.1} parent=0
    #allocation2 [shape = 'u8[8192]{0}', space=vmem, size = 0x2000, scoped, tag = 'input window, operand 0']
    #allocation3 [shape = 's32[2]{0}', space=sflag, size = 0x8, scoped, tag = 'scoped memory for tpu_custom_call.1']
    #allocation4 [shape = 's32[2]{0}', space=sflag, size = 0x8, scoped, tag = 'scoped memory for tpu_custom_call.1']
    #allocation5 [shape = 'u8[4096]{0}', space=vmem, size = 0x1000, scoped, tag = 'output window, operand 0']
    %10 = vsyncpa [#allocation3], 0
    %s11 = scalar_lea.sflag [#allocation3], 1
    %12 = vsyncpa %s11, 0
    %13 = vsyncpa [#allocation4], 0
    %s14 = scalar_lea.sflag [#allocation4], 1
    %15 = vsyncpa %s14, 0
    loop: start=0, step=1, limit=4
    $region2: #{tpu_custom_call.1} parent=1 // loop_pre_header
      _
    $region3: #{tpu_custom_call.1} parent=1 // loop_header
      %s17 = sphi 0, %s21
      %p18 = scmp.ge.s32.totalorder %s17, 4
      %s24 = sphi 0, %s36
      %s25 = sphi 0, %s32
      %s26 = sphi 0, %s24
      %s27 = sphi 0, %s25
      %s28 = sphi 0, %s26
      %s29 = sphi 0, %s27
      %s41 = sphi 0, %s43
      %s44 = sphi 0, %s41
      %s45 = sphi 0, %s44
      %s61 = sphi 0, %s45
      %s65 = sphi 0, %s65
      %s67 = sphi 0, %s65
      %s68 = sphi 0, %s67
      %s82 = sphi 0, %s68
      %s86 = sphi 0, %s86
      %s88 = sphi 0, %s86
      %s89 = sphi 0, %s88
      %s103 = sphi 0, %s89
      %s107 = sphi 0, %s107
      %s109 = sphi 0, %s107
      %s110 = sphi 0, %s109
      %s124 = sphi 0, %s110
      %s128 = sphi 0, %s128
      %s130 = sphi 0, %s128
      %s131 = sphi 0, %s130
      %s145 = sphi 0, %s131
      %s153 = sphi 0, %s155
      %s156 = sphi 0, %s153
      %s157 = sphi 0, %s156
      %s173 = sphi 0, %s157
    $region4: #{tpu_custom_call.1} parent=1 // loop_header_branch
      %20 = sbr.rel (%p18) target = $region8
    $region5: #{tpu_custom_call.1} parent=1 // loop_body
      %s22 = ssub.s32 %s17, 1
      %s23 = ssub.s32 %s17, 2
      %s30 = sadd.s32 1, %s25
      %p31 = scmp.ge.s32.totalorder %s30, 1
      %s32 = scalar_select %p31, 0, %s30
      %s33 = sadd.s32 1, %s24
      %s34 = scalar_select %p31, %s33, %s24
      %p35 = scmp.ge.s32.totalorder %s34, 2
      %s36 = scalar_select %p35, 0, %s34
      %s37 = ssub.s32 %s24, %s36
      %s38 = ssub.s32 %s25, %s32
      %s39 = sor.u32 %s37, %s38
      %p40 = scmp.eq.s32.totalorder %s39, 0
      %s42 = sadd.s32 %s41, 1
      %s43 = scalar_select %p40, %s41, %s42
      %p46 = pneg %p40
      %p47 = scmp.eq.s32.totalorder %s17, 1
      %p48 = por %p46, %p47
      %p49 = scmp.ne.s32.totalorder %s41, %s44
      %p50 = scmp.eq.s32.totalorder %s17, 0
      %p51 = por %p49, %p50
      %p52 = scmp.ne.s32.totalorder %s41, %s44
      %p53 = scmp.eq.s32.totalorder %s22, 1
      %p54 = por %p52, %p53
      %p55 = scmp.ne.s32.totalorder %s44, %s45
      %p56 = scmp.eq.s32.totalorder %s22, 0
      %p57 = por %p55, %p56
      %p58 = scmp.ne.s32.totalorder %s44, %s45
      %p59 = scmp.eq.s32.totalorder %s23, 1
      %p60 = por %p58, %p59
      %p62 = scmp.ne.s32.totalorder %s45, %s61
      %p63 = scmp.eq.s32.totalorder %s23, 0
      %p64 = por %p62, %p63
      %s66 = sadd.s32 %s65, 1
      %p69 = scmp.eq.s32.totalorder %s17, 1
      %p70 = scmp.ne.s32.totalorder %s65, %s67
      %p71 = scmp.eq.s32.totalorder %s17, 0
      %p72 = por %p70, %p71
      %p73 = scmp.ne.s32.totalorder %s65, %s67
      %p74 = scmp.eq.s32.totalorder %s22, 1
      %p75 = por %p73, %p74
      %p76 = scmp.ne.s32.totalorder %s67, %s68
      %p77 = scmp.eq.s32.totalorder %s22, 0
      %p78 = por %p76, %p77
      %p79 = scmp.ne.s32.totalorder %s67, %s68
      %p80 = scmp.eq.s32.totalorder %s23, 1
      %p81 = por %p79, %p80
      %p83 = scmp.ne.s32.totalorder %s68, %s82
      %p84 = scmp.eq.s32.totalorder %s23, 0
      %p85 = por %p83, %p84
      %s87 = sadd.s32 %s86, 1
      %p90 = scmp.eq.s32.totalorder %s17, 1
      %p91 = scmp.ne.s32.totalorder %s86, %s88
      %p92 = scmp.eq.s32.totalorder %s17, 0
      %p93 = por %p91, %p92
      %p94 = scmp.ne.s32.totalorder %s86, %s88
      %p95 = scmp.eq.s32.totalorder %s22, 1
      %p96 = por %p94, %p95
      %p97 = scmp.ne.s32.totalorder %s88, %s89
      %p98 = scmp.eq.s32.totalorder %s22, 0
      %p99 = por %p97, %p98
      %p100 = scmp.ne.s32.totalorder %s88, %s89
      %p101 = scmp.eq.s32.totalorder %s23, 1
      %p102 = por %p100, %p101
      %p104 = scmp.ne.s32.totalorder %s89, %s103
      %p105 = scmp.eq.s32.totalorder %s23, 0
      %p106 = por %p104, %p105
      %s108 = sadd.s32 %s107, 1
      %p111 = scmp.eq.s32.totalorder %s17, 1
      %p112 = scmp.ne.s32.totalorder %s107, %s109
      %p113 = scmp.eq.s32.totalorder %s17, 0
      %p114 = por %p112, %p113
      %p115 = scmp.ne.s32.totalorder %s107, %s109
      %p116 = scmp.eq.s32.totalorder %s22, 1
      %p117 = por %p115, %p116
      %p118 = scmp.ne.s32.totalorder %s109, %s110
      %p119 = scmp.eq.s32.totalorder %s22, 0
      %p120 = por %p118, %p119
      %p121 = scmp.ne.s32.totalorder %s109, %s110
      %p122 = scmp.eq.s32.totalorder %s23, 1
      %p123 = por %p121, %p122
      %p125 = scmp.ne.s32.totalorder %s110, %s124
      %p126 = scmp.eq.s32.totalorder %s23, 0
      %p127 = por %p125, %p126
      %s129 = sadd.s32 %s128, 1
      %p132 = scmp.eq.s32.totalorder %s17, 1
      %p133 = scmp.ne.s32.totalorder %s128, %s130
      %p134 = scmp.eq.s32.totalorder %s17, 0
      %p135 = por %p133, %p134
      %p136 = scmp.ne.s32.totalorder %s128, %s130
      %p137 = scmp.eq.s32.totalorder %s22, 1
      %p138 = por %p136, %p137
      %p139 = scmp.ne.s32.totalorder %s130, %s131
      %p140 = scmp.eq.s32.totalorder %s22, 0
      %p141 = por %p139, %p140
      %p142 = scmp.ne.s32.totalorder %s130, %s131
      %p143 = scmp.eq.s32.totalorder %s23, 1
      %p144 = por %p142, %p143
      %p146 = scmp.ne.s32.totalorder %s131, %s145
      %p147 = scmp.eq.s32.totalorder %s23, 0
      %p148 = por %p146, %p147
      %s149 = ssub.s32 %s24, %s36
      %s150 = ssub.s32 %s25, %s32
      %s151 = sor.u32 %s149, %s150
      %p152 = scmp.eq.s32.totalorder %s151, 0
      %s154 = sadd.s32 %s153, 1
      %s155 = scalar_select %p152, %s153, %s154
      %p158 = pneg %p152
      %p159 = scmp.eq.s32.totalorder %s17, 1
      %p160 = por %p158, %p159
      %p161 = scmp.ne.s32.totalorder %s153, %s156
      %p162 = scmp.eq.s32.totalorder %s17, 0
      %p163 = por %p161, %p162
      %p164 = scmp.ne.s32.totalorder %s153, %s156
      %p165 = scmp.eq.s32.totalorder %s22, 1
      %p166 = por %p164, %p165
      %p167 = scmp.ne.s32.totalorder %s156, %s157
      %p168 = scmp.eq.s32.totalorder %s22, 0
      %p169 = por %p167, %p168
      %p170 = scmp.ne.s32.totalorder %s156, %s157
      %p171 = scmp.eq.s32.totalorder %s23, 1
      %p172 = por %p170, %p171
      %p174 = scmp.ne.s32.totalorder %s157, %s173
      %p175 = scmp.eq.s32.totalorder %s23, 0
      %p176 = por %p174, %p175
      %p177 = scmp.le.s32.totalorder 1, %s17
      %p178 = scmp.lt.s32.totalorder %s17, 3
      %p179 = pnand %p177, %p178
      %p180 = pneg %p179
      // Predicated region
      $region9: #{tpu_custom_call.1} parent=5 // pred_check
        _
      $region10: #{tpu_custom_call.1} parent=5 // pred_check_branch
        %182 = sbr.rel (%p179) target = $region12
      $region11: #{tpu_custom_call.1} parent=5 // pred_region
        %s183 = ssub.s32 %s17, 1
        // Predicated region
        $region13: #{tpu_custom_call.1} parent=11 // pred_check
          %p184 = pneg %p78
        $region14: #{tpu_custom_call.1} parent=11 // pred_check_branch
          %186 = sbr.rel (%p184) target = $region16
        $region15: #{tpu_custom_call.1} parent=11 // pred_region
          _
        $region16: #{tpu_custom_call.1} parent=11 // pred_fallthru
          _
        // Predicated region
        $region17: #{tpu_custom_call.1} parent=11 // pred_check
          %p187 = pneg %p99
        $region18: #{tpu_custom_call.1} parent=11 // pred_check_branch
          %189 = sbr.rel (%p187) target = $region20
        $region19: #{tpu_custom_call.1} parent=11 // pred_region
          _
        $region20: #{tpu_custom_call.1} parent=11 // pred_fallthru
          _
        // Predicated region
        $region21: #{tpu_custom_call.1} parent=11 // pred_check
          %p190 = pneg %p120
        $region22: #{tpu_custom_call.1} parent=11 // pred_check_branch
          %192 = sbr.rel (%p190) target = $region24
        $region23: #{tpu_custom_call.1} parent=11 // pred_region
          _
        $region24: #{tpu_custom_call.1} parent=11 // pred_fallthru
          _
        // Predicated region
        $region25: #{tpu_custom_call.1} parent=11 // pred_check
          %p193 = pneg %p141
        $region26: #{tpu_custom_call.1} parent=11 // pred_check_branch
          %195 = sbr.rel (%p193) target = $region28
        $region27: #{tpu_custom_call.1} parent=11 // pred_region
          _
        $region28: #{tpu_custom_call.1} parent=11 // pred_fallthru
          _
      $region12: #{tpu_custom_call.1} parent=5 // pred_fallthru
        _
      %p196 = scmp.lt.s32.totalorder %s17, 2
      // Predicated region
      $region29: #{tpu_custom_call.1} parent=5 // pred_check
        %p197 = pneg %p196
      $region30: #{tpu_custom_call.1} parent=5 // pred_check_branch
        %199 = sbr.rel (%p197) target = $region32
      $region31: #{tpu_custom_call.1} parent=5 // pred_region
        // Predicated region
        $region33: #{tpu_custom_call.1} parent=31 // pred_check
          %p200 = pneg %p51
        $region34: #{tpu_custom_call.1} parent=31 // pred_check_branch
          %202 = sbr.rel (%p200) target = $region36
        $region35: #{tpu_custom_call.1} parent=31 // pred_region
          %s203 = sand.u32 %s41, 1
          %s204 = scalar_lea.sflag [#allocation3], %s203
          %s205 = sand.u32 %s41, 1
          %s206 = smul.addr %s205, 8
          %s207 = scalar_lea.vmem [#allocation2], %s206
          %s208 = smul.u32 2, %s25
          %s210 = ssub.s32 128, 128
          %211 = vsyncadd %s204, %s210
          %s212 = smul.addr %s24, 4
          %s213 = sadd.s32 %s208, %s212
          %s214 = smul.addr %s213, 32
          %s215 = scalar_lea.hbm %s0, %s214
          %s216 = sshll.u32 %s207, 4
          %s217 = int_to_ptr.vmem [resolvable:$true] %s216
          %222 = dma.hbm_to_vmem [thread:$0]  %s215, 128, %s217, %s204, 64, 64, 4
        $region36: #{tpu_custom_call.1} parent=31 // pred_fallthru
          _
      $region32: #{tpu_custom_call.1} parent=5 // pred_fallthru
        _
      %p223 = scmp.le.s32.totalorder 1, %s17
      %p224 = scmp.lt.s32.totalorder %s17, 3
      %p225 = pnand %p223, %p224
      %p226 = pneg %p225
      // Predicated region
      $region37: #{tpu_custom_call.1} parent=5 // pred_check
        _
      $region38: #{tpu_custom_call.1} parent=5 // pred_check_branch
        %228 = sbr.rel (%p225) target = $region40
      $region39: #{tpu_custom_call.1} parent=5 // pred_region
        %s229 = ssub.s32 %s17, 1
        %s230 = sand.u32 %s44, 1
        %s231 = scalar_lea.sflag [#allocation3], %s230
        %s232 = sand.u32 %s44, 1
        %s233 = smul.addr %s232, 8
        %s234 = scalar_lea.vmem [#allocation2], %s233
        // Predicated region
        $region41: #{tpu_custom_call.1} parent=39 // pred_check
          %p235 = pneg %p57
        $region42: #{tpu_custom_call.1} parent=39 // pred_check_branch
          %237 = sbr.rel (%p235) target = $region44
        $region43: #{tpu_custom_call.1} parent=39 // pred_region
          %238 = dma.done %s231, 128
        $region44: #{tpu_custom_call.1} parent=39 // pred_fallthru
          _
        %s239 = sand.u32 %s44, 1
        %s240 = scalar_lea.sflag [#allocation3], %s239
        %s241 = sand.u32 %s44, 1
        %s242 = smul.addr %s241, 8
        %s243 = scalar_lea.vmem [#allocation2], %s242
        %p244 = pneg %p57
        %p245 = pneg %p54
        %p246 = pneg %p78
        %p247 = pneg %p75
        %p248 = pneg %p99
        %p249 = pneg %p96
        %p250 = pneg %p120
        %p251 = pneg %p117
        %p252 = pneg %p141
        %p253 = pneg %p138
        %p254 = pneg %p169
        %p255 = pneg %p166
        %s256 = sand.u32 %s156, 1
        %s257 = scalar_lea.sflag [#allocation4], %s256
        %s258 = sand.u32 %s156, 1
        %s259 = smul.addr %s258, 4
        %s260 = scalar_lea.vmem [#allocation5], %s259
        %s261 = smul.u32 2, %s27
        %s262 = smul.u32 2, %s27
        %v263 = vld [vmem:[%s234] sm:$0xf]
        %s264 = scalar_lea.vmem %s234, 4 [#allocation2]
        %v265 = vld [vmem:[%s264] sm:$0xf]
        %v266 = vld [vmem:[%s1] sm:$0xff]
        %v267 = vld [vmem:[%s1 + $0x8] sm:$0xff]
        %v268 = vld [vmem:[%s1 + $0x10] sm:$0xff]
        %v269 = vld [vmem:[%s1 + $0x18] sm:$0xff]
        %v270 = vld [vmem:[%s2] sm:$0xff]
        %v271 = vld [vmem:[%s2 + $0x8] sm:$0xff]
        %v272 = vld [vmem:[%s2 + $0x10] sm:$0xff]
        %v273 = vld [vmem:[%s2 + $0x18] sm:$0xff]
        %275 = vset.pattern.permute.xlu0 0
        %276 = vperm.xlu0 %275, %v270
        %v277 = vpop.permute.xlu0 %276
        %280 = vset.pattern.permute.xlu0 0
        %281 = vperm.xlu0 %280, %v271
        %v282 = vpop.permute.xlu0 %281
        %285 = vset.pattern.permute.xlu0 0
        %286 = vperm.xlu0 %285, %v272
        %v287 = vpop.permute.xlu0 %286
        %290 = vset.pattern.permute.xlu0 0
        %291 = vperm.xlu0 %290, %v273
        %v292 = vpop.permute.xlu0 %291
        %v296 = vunpack.c.l.s4 1983009808
        %v297 = vunpack.c.0.s8 %v296
        %v298 = vlaneseq
        %v299 = vshrl.u32 %v298, 7
        %v300 = vsub.s32 %v297, %v299
        %v301 = vrot.slane %v263, %v300
        %v302 = vcombine.high %v301, %v301
        %vm303 = vcmask 15360
        %v305 = vsel %vm303, %v266, 0
        %v308 = vsel %vm303, %v267, 0
        %v311 = vsel %vm303, %v268, 0
        %v314 = vsel %vm303, %v269, 0
        %vm316 = vcmask 1041408
        %v317 = vsel %vm316, %v301, 0
        %v319 = vsel %vm316, %v302, 0
        %321 = vmatprep.subr.mxu0 %v319
        %322 = vmatpush1.msra.mxu0 %v317
        %323 = vmatprep.subr.mxu0 0.0
        %324 = vmatpush1.msra.mxu0 0.0
        %325 = vmatprep.subr.mxu0 0.0
        %326 = vmatpush1.msra.mxu0 0.0
        %327 = vmatprep.subr.mxu0 0.0
        %328 = vmatpush1.msra.mxu0 0.0
        %329 = vmatprep.subr.mxu0 0.0
        %330 = vmatpush1.msra.mxu0 0.0
        %331 = vmatprep.subr.mxu0 0.0
        %332 = vmatpush1.msra.mxu0 0.0
        %333 = vmatprep.subr.mxu0 0.0
        %334 = vmatpush1.msra.mxu0 0.0
        %335 = vmatprep.subr.mxu0 0.0
        %336 = vmatpush1.msra.mxu0 0.0
        %337 = vmatprep.subr.mxu0 0.0
        %338 = vmatpush1.msra.mxu0 0.0
        %339 = vmatprep.subr.mxu0 0.0
        %340 = vmatpush1.msra.mxu0 0.0
        %341 = vmatprep.subr.mxu0 0.0
        %342 = vmatpush1.msra.mxu0 0.0
        %343 = vmatprep.subr.mxu0 0.0
        %344 = vmatpush1.msra.mxu0 0.0
        %345 = vmatprep.subr.mxu0 0.0
        %346 = vmatpush1.msra.mxu0 0.0
        %347 = vmatprep.subr.mxu0 0.0
        %348 = vmatpush1.msra.mxu0 0.0
        %349 = vmatprep.subr.mxu0 0.0
        %350 = vmatpush1.msra.mxu0 0.0
        %351 = vmatprep.subr.mxu0 0.0
        %352 = vmatpush1.msra.mxu0 0.0
        %353 = vmatprep.subr.mxu0 0.0
        %354 = vmatpush1.msra.mxu0 0.0
        %355 = vmatprep.subr.mxu0 0.0
        %356 = vmatpush1.msra.mxu0 0.0
        %357 = vmatprep.subr.mxu0 0.0
        %358 = vmatpush1.msra.mxu0 0.0
        %359 = vmatprep.subr.mxu0 0.0
        %360 = vmatpush1.msra.mxu0 0.0
        %361 = vmatprep.subr.mxu0 0.0
        %362 = vmatpush1.msra.mxu0 0.0
        %363 = vmatprep.subr.mxu0 0.0
        %364 = vmatpush1.msra.mxu0 0.0
        %365 = vmatprep.subr.mxu0 0.0
        %366 = vmatpush1.msra.mxu0 0.0
        %367 = vmatprep.subr.mxu0 0.0
        %368 = vmatpush1.msra.mxu0 0.0
        %369 = vmatprep.subr.mxu0 0.0
        %370 = vmatpush1.msra.mxu0 0.0
        %371 = vmatprep.subr.mxu0 0.0
        %372 = vmatpush1.msra.mxu0 0.0
        %373 = vmatprep.subr.mxu0 0.0
        %374 = vmatpush1.msra.mxu0 0.0
        %375 = vmatprep.subr.mxu0 0.0
        %376 = vmatpush1.msra.mxu0 0.0
        %377 = vmatprep.subr.mxu0 0.0
        %378 = vmatpush1.msra.mxu0 0.0
        %379 = vmatprep.subr.mxu0 0.0
        %380 = vmatpush1.msra.mxu0 0.0
        %381 = vmatprep.subr.mxu0 0.0
        %382 = vmatpush1.msra.mxu0 0.0
        %383 = vmatprep.subr.mxu0 0.0
        %384 = vmatpush1.msra.mxu0 0.0
        %385 = vmatprep.mubr.f32.mxu0 0.0
        %386 = vmatmul.mubr.f32.gmra.mrb[0].mxu0 %v305
        %v387 = vpop.f32.mrb[0].mxu0
        %v388 = vadd.f32 %v277, %v387
        %v389 = vpop.f32.mrb[0].mxu0
        %v390 = vadd.f32 %v277, %v389
        %391 = vmatprep.mubr.f32.mxu0 0.0
        %392 = vmatmul.mubr.f32.gmra.mrb[0].mxu0 %v308
        %v393 = vpop.f32.mrb[0].mxu0
        %v394 = vadd.f32 %v282, %v393
        %v395 = vpop.f32.mrb[0].mxu0
        %v396 = vadd.f32 %v282, %v395
        %397 = vmatprep.mubr.f32.mxu0 0.0
        %398 = vmatmul.mubr.f32.gmra.mrb[0].mxu0 %v311
        %v399 = vpop.f32.mrb[0].mxu0
        %v400 = vadd.f32 %v287, %v399
        %v401 = vpop.f32.mrb[0].mxu0
        %v402 = vadd.f32 %v287, %v401
        %403 = vmatprep.mubr.f32.mxu0 0.0
        %404 = vmatmul.mubr.f32.gmra.mrb[0].mxu0 %v314
        %v405 = vpop.f32.mrb[0].mxu0
        %v406 = vadd.f32 %v292, %v405
        %v407 = vpop.f32.mrb[0].mxu0
        %v408 = vadd.f32 %v292, %v407
        %409 = vdwg.mxu0
        %v410 = vmax.f32 %v388, 0.0
        %v411 = vmax.f32 %v390, 0.0
        %v412 = vmax.f32 %v394, 0.0
        %v413 = vmax.f32 %v396, 0.0
        %v414 = vmax.f32 %v400, 0.0
        %v415 = vmax.f32 %v402, 0.0
        %v416 = vmax.f32 %v406, 0.0
        %v417 = vmax.f32 %v408, 0.0
        %v418 = vld [vmem:[%s3] sm:$0x3]
        %v419 = vld [vmem:[%s4] sm:$0x3]
        %421 = vset.pattern.permute.xlu0 0
        %422 = vperm.xlu0 %421, %v419
        %v423 = vpop.permute.xlu0 %422
        %vm425 = vcmask 261120
        %v427 = vsel %vm425, %v418, 0
        %429 = vmatprep.subr.mxu0 %v411
        %430 = vmatpush1.msra.mxu0 %v410
        %431 = vmatprep.subr.mxu0 %v413
        %432 = vmatpush1.msra.mxu0 %v412
        %433 = vmatprep.subr.mxu0 %v415
        %434 = vmatpush1.msra.mxu0 %v414
        %435 = vmatprep.subr.mxu0 %v417
        %436 = vmatpush1.msra.mxu0 %v416
        %437 = vmatprep.subr.mxu0 0.0
        %438 = vmatpush1.msra.mxu0 0.0
        %439 = vmatprep.subr.mxu0 0.0
        %440 = vmatpush1.msra.mxu0 0.0
        %441 = vmatprep.subr.mxu0 0.0
        %442 = vmatpush1.msra.mxu0 0.0
        %443 = vmatprep.subr.mxu0 0.0
        %444 = vmatpush1.msra.mxu0 0.0
        %445 = vmatprep.subr.mxu0 0.0
        %446 = vmatpush1.msra.mxu0 0.0
        %447 = vmatprep.subr.mxu0 0.0
        %448 = vmatpush1.msra.mxu0 0.0
        %449 = vmatprep.subr.mxu0 0.0
        %450 = vmatpush1.msra.mxu0 0.0
        %451 = vmatprep.subr.mxu0 0.0
        %452 = vmatpush1.msra.mxu0 0.0
        %453 = vmatprep.subr.mxu0 0.0
        %454 = vmatpush1.msra.mxu0 0.0
        %455 = vmatprep.subr.mxu0 0.0
        %456 = vmatpush1.msra.mxu0 0.0
        %457 = vmatprep.subr.mxu0 0.0
        %458 = vmatpush1.msra.mxu0 0.0
        %459 = vmatprep.subr.mxu0 0.0
        %460 = vmatpush1.msra.mxu0 0.0
        %461 = vmatprep.subr.mxu0 0.0
        %462 = vmatpush1.msra.mxu0 0.0
        %463 = vmatprep.subr.mxu0 0.0
        %464 = vmatpush1.msra.mxu0 0.0
        %465 = vmatprep.subr.mxu0 0.0
        %466 = vmatpush1.msra.mxu0 0.0
        %467 = vmatprep.subr.mxu0 0.0
        %468 = vmatpush1.msra.mxu0 0.0
        %469 = vmatprep.subr.mxu0 0.0
        %470 = vmatpush1.msra.mxu0 0.0
        %471 = vmatprep.subr.mxu0 0.0
        %472 = vmatpush1.msra.mxu0 0.0
        %473 = vmatprep.subr.mxu0 0.0
        %474 = vmatpush1.msra.mxu0 0.0
        %475 = vmatprep.subr.mxu0 0.0
        %476 = vmatpush1.msra.mxu0 0.0
        %477 = vmatprep.subr.mxu0 0.0
        %478 = vmatpush1.msra.mxu0 0.0
        %479 = vmatprep.subr.mxu0 0.0
        %480 = vmatpush1.msra.mxu0 0.0
        %481 = vmatprep.subr.mxu0 0.0
        %482 = vmatpush1.msra.mxu0 0.0
        %483 = vmatprep.subr.mxu0 0.0
        %484 = vmatpush1.msra.mxu0 0.0
        %485 = vmatprep.subr.mxu0 0.0
        %486 = vmatpush1.msra.mxu0 0.0
        %487 = vmatprep.subr.mxu0 0.0
        %488 = vmatpush1.msra.mxu0 0.0
        %489 = vmatprep.subr.mxu0 0.0
        %490 = vmatpush1.msra.mxu0 0.0
        %491 = vmatprep.subr.mxu0 0.0
        %492 = vmatpush1.msra.mxu0 0.0
        %493 = vmatprep.mubr.f32.mxu0 0.0
        %494 = vmatmul.mubr.f32.gmra.mrb[0].mxu0 %v427
        %v495 = vpop.f32.mrb[0].mxu0
        %v496 = vadd.f32 %v423, %v495
        %v497 = vpop.f32.mrb[0].mxu0
        %v498 = vadd.f32 %v423, %v497
        %499 = vdwg.mxu0
        %v502 = vcombine.low %v496, %v498
        %v504 = vunpack.c.l.s4 1983009808
        %v505 = vunpack.c.0.s8 %v504
        %v506 = vlaneseq
        %v507 = vshrl.u32 %v506, 7
        %v508 = vsub.s32 %v505, %v507
        %v509 = vrot.slane %v502, %v508
        %v511 = vadd.f32 %v265, %v509
        %512 = vst [vmem:[%s260] sm:$0xf] %v511
        %s513 = sand.u32 %s156, 1
        %s514 = scalar_lea.sflag [#allocation4], %s513
        %s515 = sand.u32 %s156, 1
        %s516 = smul.addr %s515, 4
        %s517 = scalar_lea.vmem [#allocation5], %s516
        // Predicated region
        $region45: #{tpu_custom_call.1} parent=39 // pred_check
          %p518 = pneg %p166
        $region46: #{tpu_custom_call.1} parent=39 // pred_check_branch
          %520 = sbr.rel (%p518) target = $region48
        $region47: #{tpu_custom_call.1} parent=39 // pred_region
          %s521 = smul.u32 2, %s27
          %s523 = ssub.s32 64, 64
          %524 = vsyncadd %s514, %s523
          %s525 = sadd.s32 %s521, 2
          %s526 = smul.addr %s26, 4
          %s527 = sadd.s32 %s525, %s526
          %s528 = smul.addr %s527, 32
          %s529 = scalar_lea.hbm %s5, %s528
          %s531 = sshll.u32 %s517, 4
          %s532 = int_to_ptr.vmem [resolvable:$true] %s531
          %534 = dma.vmem_to_hbm [thread:$0]  %s532, 64, %s529, %s514
        $region48: #{tpu_custom_call.1} parent=39 // pred_fallthru
          _
      $region40: #{tpu_custom_call.1} parent=5 // pred_fallthru
        _
      %p535 = scmp.le.s32.totalorder 2, %s17
      // Predicated region
      $region49: #{tpu_custom_call.1} parent=5 // pred_check
        %p536 = pneg %p535
      $region50: #{tpu_custom_call.1} parent=5 // pred_check_branch
        %538 = sbr.rel (%p536) target = $region52
      $region51: #{tpu_custom_call.1} parent=5 // pred_region
        %s539 = ssub.s32 %s17, 2
        // Predicated region
        $region53: #{tpu_custom_call.1} parent=51 // pred_check
          %p540 = pneg %p172
        $region54: #{tpu_custom_call.1} parent=51 // pred_check_branch
          %542 = sbr.rel (%p540) target = $region56
        $region55: #{tpu_custom_call.1} parent=51 // pred_region
          %s543 = sand.u32 %s157, 1
          %s544 = scalar_lea.sflag [#allocation4], %s543
          %s545 = sand.u32 %s157, 1
          %s546 = smul.addr %s545, 4
          %s547 = scalar_lea.vmem [#allocation5], %s546
          %548 = dma.done %s544, 64
        $region56: #{tpu_custom_call.1} parent=51 // pred_fallthru
          _
      $region52: #{tpu_custom_call.1} parent=5 // pred_fallthru
        _
    $region6: #{tpu_custom_call.1} parent=1 // loop_footer
      %s21 = sadd.s32 1, %s17
    $region7: #{tpu_custom_call.1} parent=1 // loop_footer_branch
      %16 = sbr.rel target = $region3
    $region8: #{tpu_custom_call.1} parent=1 // loop_exit
      _
    %549 = vsyncpa [#allocation3], 1
    %s550 = scalar_lea.sflag [#allocation3], 1
    %551 = vsyncpa %s550, 1
    %552 = vsyncpa [#allocation4], 1
    %s553 = scalar_lea.sflag [#allocation4], 1
    %554 = vsyncpa %s553, 1

</llo_original>
